<compile_context>
chip_gen: v7x
topology: tpu7x:2x2x1
jax: 0.10.0
libtpu: 0.0.40
codegen_flags: <defaults>
</compile_context>

<pallas_src>
import jax
import jax.numpy as jnp
from jax import lax
from jax.experimental import pallas as pl
from jax.experimental.pallas import tpu as pltpu

# ~128K lanes: at C=4 f32 each grid step moves ~5 MB -> >90% of HBM roofline
# on v5e/v6e/v7x while the double-buffered footprint stays ~25 MB.
_MAX_TILE_LANES = 128 * 1024


# ----------------------------------------------------------------------------
# Pallas kernel: lane-dense channel concatenation (the AddCoords materializer)
# ----------------------------------------------------------------------------
def _concat_coords_kernel(x_ref, coord_ref, o_ref):
    # x_ref: (1, C, TS); coord_ref: (n_coord, TS); o_ref: (1, C + n_coord, TS).
    # Channels are the sublane axis, flattened spatial (H*W) is the lane axis.
    C = x_ref.shape[1]
    # Pass-through of the input channels (the unavoidable HBM cost center).
    o_ref[0, :C, :] = x_ref[0, :, :]
    # All generated channels in one multi-sublane store (v5e has 1 vst slot).
    o_ref[0, C:, :] = coord_ref[:, :]


# ----------------------------------------------------------------------------
# Tile-size / VMEM budgeting helpers
# ----------------------------------------------------------------------------
def _vmem_capacity_bytes() -> int:
    """Physical VMEM of the current chip; conservative (v7x) fallback."""
    try:
        return int(pltpu.get_tpu_info().vmem_capacity_bytes)
    except Exception:
        return 64 * 1024 * 1024


def _sublane_rows(channels: int, itemsize: int) -> int:
    """Round a channel count up to the VMEM sublane-tiling multiple."""
    mult = max(8, 32 // itemsize)       # 8 (f32) / 16 (bf16) / 32 (int8)
    return -(-channels // mult) * mult


def _balance_for_two_cores(S: int, ts: int, batch: int) -> int:
    """v7x shards the parallel grid axes over 2 TensorCores; make the total
    grid-point count even (when it is cheap) so neither core sits idle."""
    def n_tiles(t: int) -> int:
        return -(-S // t)

    if batch % 2 == 0 or S <= 128 or (batch * n_tiles(ts)) % 2 == 0:
        return ts
    start = (min(ts, S) // 128) * 128
    floor = max(128, start // 2)
    t = start
    while t >= floor:
        if n_tiles(t) % 2 == 0:
            return t
        t -= 128
    return ts  # could not balance cheaply; keep the bandwidth-optimal tile


def _pick_spatial_tile(S: int, per_lane_bytes: int, batch: int,
                       vmem_cap: int) -> int:
    """Largest lane tile whose double-buffered footprint fits ~1/3 of VMEM."""
    budget = vmem_cap // 3                      # leave room for Mosaic scratch
    ts = budget // (2 * per_lane_bytes)         # 2x: double-buffered pipeline
    ts = max(128, (ts // 128) * 128)            # lane multiple of 128
    ts = min(ts, _MAX_TILE_LANES)
    if ts >= S:
        ts = S                                  # single full-extent tile
    return _balance_for_two_cores(S, ts, batch)


# ----------------------------------------------------------------------------
# Coordinate plane (input-independent, generated once per call)
# ----------------------------------------------------------------------------
def _coord_plane(H: int, W: int, with_r: bool, dtype) -> jax.Array:
    """(n_coord, H*W) coordinate channels, matching the PyTorch arithmetic."""
    i = jnp.arange(H, dtype=jnp.float32)[:, None]
    j = jnp.arange(W, dtype=jnp.float32)[None, :]
    # jnp division (not Python) so H==1 / W==1 gives inf/NaN like torch.
    xx = jnp.broadcast_to((i / jnp.float32(H - 1)) * 2.0 - 1.0, (H, W))
    yy = jnp.broadcast_to((j / jnp.float32(W - 1)) * 2.0 - 1.0, (H, W))
    planes = [xx.astype(dtype), yy.astype(dtype)]
    if with_r:
        rr = jnp.sqrt((planes[0] - 0.5) ** 2 + (planes[1] - 0.5) ** 2)
        planes.append(rr.astype(dtype))
    return jnp.stack(planes, axis=0).reshape(len(planes), H * W)


# ----------------------------------------------------------------------------
# AddCoords.forward (Pallas)
# ----------------------------------------------------------------------------
def add_coords(x: jax.Array, with_r: bool = False,
               *, spatial_tile: int | None = None) -> jax.Array:
    """Pallas implementation of AddCoords.forward (NCHW)."""
    B, C, H, W = x.shape
    n_coord = 3 if with_r else 2
    c_out = C + n_coord
    S = H * W
    itemsize = jnp.dtype(x.dtype).itemsize

    cap = _vmem_capacity_bytes()
    # Sublane-padded per-lane footprint of (input + coord + output) tiles.
    per_lane = (_sublane_rows(C, itemsize) + _sublane_rows(n_coord, itemsize)
                + _sublane_rows(c_out, itemsize)) * itemsize

    if spatial_tile is None:
        TS = _pick_spatial_tile(S, per_lane, B, cap)
    else:                                   # explicit override (used in tests)
        TS = min(spatial_tile, S)
        if TS < S:
            assert TS % 128 == 0, "spatial_tile must be a multiple of 128"

    # vmem limit from the actual tile footprint (+ headroom for temporaries).
    vmem_limit = int(min(cap, max(16 << 20, 2 * per_lane * TS + (4 << 20))))

    coords = _coord_plane(H, W, with_r, x.dtype)       # (n_coord, S)
    x_flat = x.reshape(B, C, S)                        # lane-dense spatial axis
    n_s = pl.cdiv(S, TS)

    out_flat = pl.pallas_call(
        _concat_coords_kernel,
        out_shape=jax.ShapeDtypeStruct((B, c_out, S), x.dtype),
        grid=(n_s, B),                                 # batch innermost: coord
        in_specs=[                                     # tile reused across B
            pl.BlockSpec((1, C, TS), lambda s, b: (b, 0, s)),
            pl.BlockSpec((n_coord, TS), lambda s, b: (0, s)),
        ],
        out_specs=pl.BlockSpec((1, c_out, TS), lambda s, b: (b, 0, s)),
        compiler_params=pltpu.CompilerParams(
            dimension_semantics=("parallel", "parallel"),
            vmem_limit_bytes=vmem_limit),
    )(x_flat, coords)
    return out_flat.reshape(B, c_out, H, W)


# ----------------------------------------------------------------------------
# CoordConv.forward
# ----------------------------------------------------------------------------
def coord_conv_forward(x: jax.Array, weight: jax.Array, bias: jax.Array,
                       with_r: bool = False, stride: int = 2, padding: int = 1,
                       *, fold_coords: bool = True) -> jax.Array:
    """Full CoordConv.forward.

    fold_coords=True exploits linearity of the conv in its input channels:
    conv([x, coords], W) == conv(x, W[:, :C]) + conv(coords, W[:, C:]).
    The second term depends only on (H, W) -> a batch-independent bias map,
    so the (B, C+n_coord, H, W) AddCoords tensor is never written to HBM and
    the main conv contracts over C instead of C+n_coord channels.
    fold_coords=False follows the module's dataflow: Pallas AddCoords + conv.
    """
    B, C, H, W = x.shape
    dn = ("NCHW", "OIHW", "NCHW")
    pad = [(padding, padding), (padding, padding)]
    strides = (stride, stride)

    if fold_coords:
        # TODO(synk): in a full model, cache coord_bias per (H, W, weight) so
        # it is computed once, not per forward call.
        n_coord = 3 if with_r else 2
        coords = _coord_plane(H, W, with_r, x.dtype).reshape(1, n_coord, H, W)
        y = lax.conv_general_dilated(x, weight[:, :C], strides, pad,
                                     dimension_numbers=dn)
        coord_bias = lax.conv_general_dilated(coords, weight[:, C:], strides,
                                              pad, dimension_numbers=dn)
        y = y + coord_bias
    else:
        ret = add_coords(x, with_r=with_r)
        y = lax.conv_general_dilated(ret, weight, strides, pad,
                                     dimension_numbers=dn)
    if bias is not None:
        y = y + bias[None, :, None, None]
    return y


# ----------------------------------------------------------------------------
# Pure-JAX reference mirroring the PyTorch forward
# ----------------------------------------------------------------------------
def _add_coords_ref(x: jax.Array, with_r: bool = False) -> jax.Array:
    B, C, H, W = x.shape
    i = jnp.arange(H, dtype=jnp.float32)[:, None]
    j = jnp.arange(W, dtype=jnp.float32)[None, :]
    xx = jnp.broadcast_to((i / jnp.float32(H - 1)) * 2.0 - 1.0, (H, W))
    yy = jnp.broadcast_to((j / jnp.float32(W - 1)) * 2.0 - 1.0, (H, W))
    xx_c = jnp.broadcast_to(xx, (B, 1, H, W)).astype(x.dtype)
    yy_c = jnp.broadcast_to(yy, (B, 1, H, W)).astype(x.dtype)
    out = jnp.concatenate([x, xx_c, yy_c], axis=1)
    if with_r:
        rr = jnp.sqrt((xx_c - 0.5) ** 2 + (yy_c - 0.5) ** 2)
        out = jnp.concatenate([out, rr], axis=1)
    return out


if __name__ == "__main__":
    key = jax.random.PRNGKey(0)
    kx, kw, kb, k2, k3, k4 = jax.random.split(key, 6)

    # Primary small shape consistent with the module.
    B, C, H, W = 2, 4, 16, 16
    x = jax.random.normal(kx, (B, C, H, W), dtype=jnp.float32)

    # AddCoords, with_r=False.
    out = jax.block_until_ready(add_coords(x, with_r=False))
    ref = _add_coords_ref(x, with_r=False)
    assert out.shape == (B, C + 2, H, W), out.shape
    assert out.dtype == x.dtype
    assert jnp.allclose(out, ref, atol=1e-6, rtol=1e-6)

    # AddCoords, with_r=True.
    out_r = jax.block_until_ready(add_coords(x, with_r=True))
    ref_r = _add_coords_ref(x, with_r=True)
    assert out_r.shape == (B, C + 3, H, W)
    assert jnp.allclose(out_r, ref_r, atol=1e-6, rtol=1e-6)

    # Multi-tile grid with a padded last tile (S=384, TS=256 -> S % TS != 0):
    # verifies nothing from the padded lanes leaks into the real output.
    x2 = jax.random.normal(k2, (1, 3, 16, 24), dtype=jnp.float32)
    out2 = jax.block_until_ready(add_coords(x2, with_r=True, spatial_tile=256))
    assert jnp.allclose(out2, _add_coords_ref(x2, with_r=True),
                        atol=1e-6, rtol=1e-6)

    # Odd batch (exercises the two-TensorCore grid-balancing path).
    x3 = jax.random.normal(k3, (3, 4, 16, 16), dtype=jnp.float32)
    out3 = jax.block_until_ready(add_coords(x3, with_r=False))
    assert jnp.allclose(out3, _add_coords_ref(x3, with_r=False),
                        atol=1e-6, rtol=1e-6)

    # Ragged spatial extent (S=35, single full-extent tile).
    x4 = jax.random.normal(k4, (2, 4, 5, 7), dtype=jnp.float32)
    out4 = jax.block_until_ready(add_coords(x4, with_r=False))
    assert jnp.allclose(out4, _add_coords_ref(x4, with_r=False),
                        atol=1e-6, rtol=1e-6)

    # Full CoordConv forward: folded coord-bias path vs Pallas+conv vs ref.
    out_ch = 8
    w = jax.random.normal(kw, (out_ch, C + 2, 3, 3), dtype=jnp.float32) * 0.1
    b = jax.random.normal(kb, (out_ch,), dtype=jnp.float32) * 0.1
    y_fold = jax.block_until_ready(coord_conv_forward(x, w, b, with_r=False))
    y_pallas = jax.block_until_ready(
        coord_conv_forward(x, w, b, with_r=False, fold_coords=False))
    y_ref = lax.conv_general_dilated(
        ref, w, (2, 2), [(1, 1), (1, 1)],
        dimension_numbers=("NCHW", "OIHW", "NCHW")) + b[None, :, None, None]
    assert y_fold.shape == (B, out_ch, 8, 8), y_fold.shape
    assert jnp.allclose(y_fold, y_ref, atol=1e-4, rtol=1e-4)
    assert jnp.allclose(y_pallas, y_ref, atol=1e-4, rtol=1e-4)

    print("KERNEL_OK")
</pallas_src>

<mosaic_0001>
module attributes {stable_mosaic.version = 11 : i64} {
  func.func @_concat_coords_kernel(%arg0: i32, %arg1: i32, %arg2: memref<1x4x256xf32, #tpu.memory_space<vmem>>, %arg3: memref<2x256xf32, #tpu.memory_space<vmem>>, %arg4: memref<1x6x256xf32, #tpu.memory_space<vmem>>) attributes {dimension_semantics = [#tpu.dimension_semantics<parallel>, #tpu.dimension_semantics<parallel>], iteration_bounds = array<i64: 1, 2>, scalar_prefetch = 0 : i64, scratch_operands = 0 : i64, tpu.core_type = #tpu.core_type<tc>, window_params = [{transform_indices = @transform_0, window_bounds = array<i64: 1, 4, 256>}, {transform_indices = @transform_1, window_bounds = array<i64: 2, 256>}, {transform_indices = @transform_2, window_bounds = array<i64: 1, 6, 256>}]} {
    %c0 = arith.constant 0 : index
    %c0_0 = arith.constant 0 : index
    %c0_1 = arith.constant 0 : index
    %0 = vector.load %arg2[%c0, %c0_0, %c0_1] : memref<1x4x256xf32, #tpu.memory_space<vmem>>, vector<1x4x256xf32>
    %1 = vector.shape_cast %0 : vector<1x4x256xf32> to vector<4x256xf32>
    %c0_2 = arith.constant 0 : index
    %c0_3 = arith.constant 0 : index
    %c0_4 = arith.constant 0 : index
    %2 = vector.load %arg4[%c0_2, %c0_3, %c0_4] : memref<1x6x256xf32, #tpu.memory_space<vmem>>, vector<1x4x256xf32>
    %3 = vector.shape_cast %2 : vector<1x4x256xf32> to vector<4x256xf32>
    %4 = vector.shape_cast %1 : vector<4x256xf32> to vector<1x4x256xf32>
    tpu.vector_store %arg4[%c0_2, %c0_3, %c0_4], %4 {strides = array<i32>} : memref<1x6x256xf32, #tpu.memory_space<vmem>>, vector<1x4x256xf32>,
    %c0_5 = arith.constant 0 : index
    %c0_6 = arith.constant 0 : index
    %5 = vector.load %arg3[%c0_5, %c0_6] : memref<2x256xf32, #tpu.memory_space<vmem>>, vector<2x256xf32>
    %c0_7 = arith.constant 0 : index
    %c4 = arith.constant 4 : index
    %c0_8 = arith.constant 0 : index
    %6 = vector.load %arg4[%c0_7, %c4, %c0_8] : memref<1x6x256xf32, #tpu.memory_space<vmem>>, vector<1x2x256xf32>
    %7 = vector.shape_cast %6 : vector<1x2x256xf32> to vector<2x256xf32>
    %8 = vector.shape_cast %5 : vector<2x256xf32> to vector<1x2x256xf32>
    tpu.vector_store %arg4[%c0_7, %c4, %c0_8], %8 {strides = array<i32>} : memref<1x6x256xf32, #tpu.memory_space<vmem>>, vector<1x2x256xf32>,
    return
  }
  func.func @transform_0(%arg0: i32, %arg1: i32) -> (i32, i32, i32) {
    %c0_i32 = arith.constant 0 : i32
    %c0_i32_0 = arith.constant 0 : i32
    return %arg1, %c0_i32, %arg0 : i32, i32, i32
  }
  func.func @transform_1(%arg0: i32, %arg1: i32) -> (i32, i32) {
    %c0_i32 = arith.constant 0 : i32
    %c0_i32_0 = arith.constant 0 : i32
    return %c0_i32, %arg0 : i32, i32
  }
  func.func @transform_2(%arg0: i32, %arg1: i32) -> (i32, i32, i32) {
    %c0_i32 = arith.constant 0 : i32
    %c0_i32_0 = arith.constant 0 : i32
    return %arg1, %c0_i32, %arg0 : i32, i32, i32
  }
}

</mosaic_0001>

<llo_original>
// kernel: tpu_custom_call.1
$region0: #{tpu_custom_call.1}
  #allocation0 [shape = 'u32[]', space=smem, size = 0x4, offset = 0x4, fixed_abs, tag = 'smem constant byte address 0x4 - core index']
  #allocation1 [shape = 'u32[144,128]{1,0:T(1,128)}', space=vmem, size = 0x12000, scoped, tag = 'internal scratch']
  %s0 = inlined_call_operand.hbm [shape: f32[2,4,256], index: 0, kind: input, shape index: {}]
  %s1 = inlined_call_operand.hbm [shape: f32[2,256], index: 1, kind: input, shape index: {}]
  %s2 = inlined_call_operand.vmem [shape: f32[2,6,256], index: 2, kind: output, shape index: {}]
  %s3 = sld [smem:[#allocation0]]
  $region49: #{tpu_custom_call.1} parent=0
    _
  %s5 = ssub.s32 1, %s3
  %s6 = scalar_select 0, %s5, %s3
  $region1: #{tpu_custom_call.1} parent=0
    #allocation2 [shape = 'u8[8192]{0}', space=vmem, size = 0x2000, scoped, tag = 'input window, operand 0']
    #allocation3 [shape = 's32[2]{0}', space=sflag, size = 0x8, scoped, tag = 'scoped memory for tpu_custom_call.1']
    #allocation4 [shape = 'u8[2048]{0}', space=vmem, size = 0x800, scoped, tag = 'input window, operand 1, single buffered']
    #allocation5 [shape = 's32[1]{0}', space=sflag, size = 0x4, scoped, tag = 'scoped memory for tpu_custom_call.1']
    %7 = vsyncpa [#allocation3], 0
    %s8 = scalar_lea.sflag [#allocation3], 1
    %9 = vsyncpa %s8, 0
    %10 = vsyncpa [#allocation5], 0
    loop: start=0, step=1, limit=4
    $region2: #{tpu_custom_call.1} parent=1 // loop_pre_header
      _
    $region3: #{tpu_custom_call.1} parent=1 // loop_header
      %s12 = sphi 0, %s16
      %p13 = scmp.ge.s32.totalorder %s12, 4
      %s19 = sphi 0, %s31
      %s20 = sphi 0, %s27
      %s21 = sphi 0, %s19
      %s22 = sphi 0, %s20
      %s23 = sphi 0, %s21
      %s24 = sphi 0, %s22
      %s36 = sphi 0, %s38
      %s39 = sphi 0, %s36
      %s40 = sphi 0, %s39
      %s56 = sphi 0, %s40
      %s62 = sphi 0, %s64
      %s65 = sphi 0, %s62
      %s66 = sphi 0, %s65
      %s82 = sphi 0, %s66
      %s90 = sphi 0, %s92
      %s93 = sphi 0, %s90
      %s94 = sphi 0, %s93
      %s110 = sphi 0, %s94
    $region4: #{tpu_custom_call.1} parent=1 // loop_header_branch
      %15 = sbr.rel (%p13) target = $region8
    $region5: #{tpu_custom_call.1} parent=1 // loop_body
      %s17 = ssub.s32 %s12, 1
      %s18 = ssub.s32 %s12, 2
      %s25 = sadd.s32 1, %s20
      %p26 = scmp.ge.s32.totalorder %s25, 2
      %s27 = scalar_select %p26, 0, %s25
      %s28 = sadd.s32 1, %s19
      %s29 = scalar_select %p26, %s28, %s19
      %p30 = scmp.ge.s32.totalorder %s29, 1
      %s31 = scalar_select %p30, 0, %s29
      %s32 = ssub.s32 %s20, %s27
      %s33 = ssub.s32 %s19, %s31
      %s34 = sor.u32 %s32, %s33
      %p35 = scmp.eq.s32.totalorder %s34, 0
      %s37 = sadd.s32 %s36, 1
      %s38 = scalar_select %p35, %s36, %s37
      %p41 = pneg %p35
      %p42 = scmp.eq.s32.totalorder %s12, 1
      %p43 = por %p41, %p42
      %p44 = scmp.ne.s32.totalorder %s36, %s39
      %p45 = scmp.eq.s32.totalorder %s12, 0
      %p46 = por %p44, %p45
      %p47 = scmp.ne.s32.totalorder %s36, %s39
      %p48 = scmp.eq.s32.totalorder %s17, 1
      %p49 = por %p47, %p48
      %p50 = scmp.ne.s32.totalorder %s39, %s40
      %p51 = scmp.eq.s32.totalorder %s17, 0
      %p52 = por %p50, %p51
      %p53 = scmp.ne.s32.totalorder %s39, %s40
      %p54 = scmp.eq.s32.totalorder %s18, 1
      %p55 = por %p53, %p54
      %p57 = scmp.ne.s32.totalorder %s40, %s56
      %p58 = scmp.eq.s32.totalorder %s18, 0
      %p59 = por %p57, %p58
      %s60 = ssub.s32 %s19, %s31
      %p61 = scmp.eq.s32.totalorder %s60, 0
      %s63 = sadd.s32 %s62, 1
      %s64 = scalar_select %p61, %s62, %s63
      %p67 = pneg %p61
      %p68 = scmp.eq.s32.totalorder %s12, 1
      %p69 = por %p67, %p68
      %p70 = scmp.ne.s32.totalorder %s62, %s65
      %p71 = scmp.eq.s32.totalorder %s12, 0
      %p72 = por %p70, %p71
      %p73 = scmp.ne.s32.totalorder %s62, %s65
      %p74 = scmp.eq.s32.totalorder %s17, 1
      %p75 = por %p73, %p74
      %p76 = scmp.ne.s32.totalorder %s65, %s66
      %p77 = scmp.eq.s32.totalorder %s17, 0
      %p78 = por %p76, %p77
      %p79 = scmp.ne.s32.totalorder %s65, %s66
      %p80 = scmp.eq.s32.totalorder %s18, 1
      %p81 = por %p79, %p80
      %p83 = scmp.ne.s32.totalorder %s66, %s82
      %p84 = scmp.eq.s32.totalorder %s18, 0
      %p85 = por %p83, %p84
      %s86 = ssub.s32 %s20, %s27
      %s87 = ssub.s32 %s19, %s31
      %s88 = sor.u32 %s86, %s87
      %p89 = scmp.eq.s32.totalorder %s88, 0
      %s91 = sadd.s32 %s90, 1
      %s92 = scalar_select %p89, %s90, %s91
      %p95 = pneg %p89
      %p96 = scmp.eq.s32.totalorder %s12, 1
      %p97 = por %p95, %p96
      %p98 = scmp.ne.s32.totalorder %s90, %s93
      %p99 = scmp.eq.s32.totalorder %s12, 0
      %p100 = por %p98, %p99
      %p101 = scmp.ne.s32.totalorder %s90, %s93
      %p102 = scmp.eq.s32.totalorder %s17, 1
      %p103 = por %p101, %p102
      %p104 = scmp.ne.s32.totalorder %s93, %s94
      %p105 = scmp.eq.s32.totalorder %s17, 0
      %p106 = por %p104, %p105
      %p107 = scmp.ne.s32.totalorder %s93, %s94
      %p108 = scmp.eq.s32.totalorder %s18, 1
      %p109 = por %p107, %p108
      %p111 = scmp.ne.s32.totalorder %s94, %s110
      %p112 = scmp.eq.s32.totalorder %s18, 0
      %p113 = por %p111, %p112
      %p114 = scmp.le.s32.totalorder 1, %s12
      %p115 = scmp.lt.s32.totalorder %s12, 3
      %p116 = pnand %p114, %p115
      %p117 = pneg %p116
      // Predicated region
      $region9: #{tpu_custom_call.1} parent=5 // pred_check
        _
      $region10: #{tpu_custom_call.1} parent=5 // pred_check_branch
        %119 = sbr.rel (%p116) target = $region12
      $region11: #{tpu_custom_call.1} parent=5 // pred_region
        %s120 = ssub.s32 %s12, 1
        // Predicated region
        $region13: #{tpu_custom_call.1} parent=11 // pred_check
          %p121 = pneg %p78
        $region14: #{tpu_custom_call.1} parent=11 // pred_check_branch
          %123 = sbr.rel (%p121) target = $region16
        $region15: #{tpu_custom_call.1} parent=11 // pred_region
          %s124 = smul.u32 2, %s21
          %s126 = ssub.s32 64, 64
          %127 = vsyncadd [#allocation5], %s126
          %s128 = smul.addr %s124, 32
          %s129 = scalar_lea.hbm %s1, %s128
          %s131 = sshll.u32 [#allocation4], 4
          %s132 = int_to_ptr.vmem [resolvable:$true] %s131
          %134 = dma.hbm_to_vmem [thread:$0]  %s129, 64, %s132, [#allocation5]
        $region16: #{tpu_custom_call.1} parent=11 // pred_fallthru
          _
      $region12: #{tpu_custom_call.1} parent=5 // pred_fallthru
        _
      %p135 = scmp.lt.s32.totalorder %s12, 2
      // Predicated region
      $region17: #{tpu_custom_call.1} parent=5 // pred_check
        %p136 = pneg %p135
      $region18: #{tpu_custom_call.1} parent=5 // pred_check_branch
        %138 = sbr.rel (%p136) target = $region20
      $region19: #{tpu_custom_call.1} parent=5 // pred_region
        // Predicated region
        $region21: #{tpu_custom_call.1} parent=19 // pred_check
          %p139 = pneg %p46
        $region22: #{tpu_custom_call.1} parent=19 // pred_check_branch
          %141 = sbr.rel (%p139) target = $region24
        $region23: #{tpu_custom_call.1} parent=19 // pred_region
          %s142 = sand.u32 %s36, 1
          %s143 = scalar_lea.sflag [#allocation3], %s142
          %s144 = sand.u32 %s36, 1
          %s145 = smul.addr %s144, 8
          %s146 = scalar_lea.vmem [#allocation2], %s145
          %s147 = smul.u32 2, %s19
          %s149 = ssub.s32 128, 128
          %150 = vsyncadd %s143, %s149
          %s151 = smul.addr %s20, 2
          %s152 = sadd.s32 %s147, %s151
          %s153 = smul.addr %s152, 64
          %s154 = scalar_lea.hbm %s0, %s153
          %s156 = sshll.u32 %s146, 4
          %s157 = int_to_ptr.vmem [resolvable:$true] %s156
          %159 = dma.hbm_to_vmem [thread:$0]  %s154, 128, %s157, %s143
        $region24: #{tpu_custom_call.1} parent=19 // pred_fallthru
          _
      $region20: #{tpu_custom_call.1} parent=5 // pred_fallthru
        _
      %p160 = scmp.le.s32.totalorder 1, %s12
      %p161 = scmp.lt.s32.totalorder %s12, 3
      %p162 = pnand %p160, %p161
      %p163 = pneg %p162
      // Predicated region
      $region25: #{tpu_custom_call.1} parent=5 // pred_check
        _
      $region26: #{tpu_custom_call.1} parent=5 // pred_check_branch
        %165 = sbr.rel (%p162) target = $region28
      $region27: #{tpu_custom_call.1} parent=5 // pred_region
        %s166 = ssub.s32 %s12, 1
        %s167 = sand.u32 %s39, 1
        %s168 = scalar_lea.sflag [#allocation3], %s167
        %s169 = sand.u32 %s39, 1
        %s170 = smul.addr %s169, 8
        %s171 = scalar_lea.vmem [#allocation2], %s170
        // Predicated region
        $region29: #{tpu_custom_call.1} parent=27 // pred_check
          %p172 = pneg %p52
        $region30: #{tpu_custom_call.1} parent=27 // pred_check_branch
          %174 = sbr.rel (%p172) target = $region32
        $region31: #{tpu_custom_call.1} parent=27 // pred_region
          %175 = dma.done %s168, 128
        $region32: #{tpu_custom_call.1} parent=27 // pred_fallthru
          _
        // Predicated region
        $region33: #{tpu_custom_call.1} parent=27 // pred_check
          %p176 = pneg %p78
        $region34: #{tpu_custom_call.1} parent=27 // pred_check_branch
          %178 = sbr.rel (%p176) target = $region36
        $region35: #{tpu_custom_call.1} parent=27 // pred_region
          %179 = dma.done [#allocation5], 64
        $region36: #{tpu_custom_call.1} parent=27 // pred_fallthru
          _
        %s180 = sand.u32 %s39, 1
        %s181 = scalar_lea.sflag [#allocation3], %s180
        %s182 = sand.u32 %s39, 1
        %s183 = smul.addr %s182, 8
        %s184 = scalar_lea.vmem [#allocation2], %s183
        %p185 = pneg %p52
        %p186 = pneg %p49
        %p187 = pneg %p78
        %p188 = pneg %p75
        %p189 = pneg %p106
        %p190 = pneg %p103
        %s191 = smul.u32 2, %s21
        %p192 = scmp.lt.s32.totalorder %s22, 1
        %s193 = scalar_select %p192, %s22, 1
        %p194 = scmp.lt.s32.totalorder %s191, 1
        %s195 = scalar_select %p194, %s191, 1
        %s196 = smul.addr %s193, 2
        %s197 = sadd.s32 %s195, %s196
        %s198 = smul.addr %s197, 8
        %s199 = scalar_lea.vmem %s2, %s198
        %s200 = smul.u32 2, %s21
        %s201 = smul.u32 2, %s21
        %s202 = smul.u32 2, %s21
        %p203 = scmp.lt.s32.totalorder %s22, 1
        %s204 = scalar_select %p203, %s22, 1
        %p205 = scmp.lt.s32.totalorder %s202, 1
        %s206 = scalar_select %p205, %s202, 1
        %s207 = smul.addr %s204, 2
        %s208 = sadd.s32 %s206, %s207
        %s209 = smul.addr %s208, 8
        %s210 = scalar_lea.vmem %s2, %s209
        %s211 = smul.u32 2, %s21
        %v212 = vld [vmem:[%s171] sm:$0xff]
        %v214 = vcombine.high %v212, %v212
        %216 = vst [vmem:[%s210] sm:$0xf] %v212
        %217 = vst [vmem:[%s210 + $0x8] sm:$0xf] %v214
        %v218 = vld [vmem:[#allocation4] sm:$0xf]
        %v221 = vunpack.c.l.s4 1983009808
        %v222 = vunpack.c.0.s8 %v221
        %v223 = vlaneseq
        %v224 = vshrl.u32 %v223, 7
        %v225 = vsub.s32 %v222, %v224
        %v226 = vrot.slane %v218, %v225
        %v227 = vcombine.low %v226, %v226
        %230 = vst [vmem:[%s210] sm:$0x30] %v227
        %231 = vst [vmem:[%s210 + $0x8] sm:$0x30] %v226
        %s232 = smul.u32 2, %s21
        %p233 = scmp.lt.s32.totalorder %s22, 1
        %s234 = scalar_select %p233, %s22, 1
        %p235 = scmp.lt.s32.totalorder %s232, 1
        %s236 = scalar_select %p235, %s232, 1
        %s237 = smul.addr %s234, 2
        %s238 = sadd.s32 %s236, %s237
        %s239 = smul.addr %s238, 8
        %s240 = scalar_lea.vmem %s2, %s239
        // Predicated region
        $region37: #{tpu_custom_call.1} parent=27 // pred_check
          %p241 = pneg %p103
        $region38: #{tpu_custom_call.1} parent=27 // pred_check_branch
          %243 = sbr.rel (%p241) target = $region40
        $region39: #{tpu_custom_call.1} parent=27 // pred_region
          %s244 = smul.u32 2, %s21
        $region40: #{tpu_custom_call.1} parent=27 // pred_fallthru
          _
      $region28: #{tpu_custom_call.1} parent=5 // pred_fallthru
        _
      %p245 = scmp.le.s32.totalorder 2, %s12
      // Predicated region
      $region41: #{tpu_custom_call.1} parent=5 // pred_check
        %p246 = pneg %p245
      $region42: #{tpu_custom_call.1} parent=5 // pred_check_branch
        %248 = sbr.rel (%p246) target = $region44
      $region43: #{tpu_custom_call.1} parent=5 // pred_region
        %s249 = ssub.s32 %s12, 2
        // Predicated region
        $region45: #{tpu_custom_call.1} parent=43 // pred_check
          %p250 = pneg %p109
        $region46: #{tpu_custom_call.1} parent=43 // pred_check_branch
          %252 = sbr.rel (%p250) target = $region48
        $region47: #{tpu_custom_call.1} parent=43 // pred_region
          %s253 = smul.u32 2, %s23
          %p254 = scmp.lt.s32.totalorder %s24, 1
          %s255 = scalar_select %p254, %s24, 1
          %p256 = scmp.lt.s32.totalorder %s253, 1
          %s257 = scalar_select %p256, %s253, 1
          %s258 = smul.addr %s255, 2
          %s259 = sadd.s32 %s257, %s258
          %s260 = smul.addr %s259, 8
          %s261 = scalar_lea.vmem %s2, %s260
        $region48: #{tpu_custom_call.1} parent=43 // pred_fallthru
          _
      $region44: #{tpu_custom_call.1} parent=5 // pred_fallthru
        _
    $region6: #{tpu_custom_call.1} parent=1 // loop_footer
      %s16 = sadd.s32 1, %s12
    $region7: #{tpu_custom_call.1} parent=1 // loop_footer_branch
      %11 = sbr.rel target = $region3
    $region8: #{tpu_custom_call.1} parent=1 // loop_exit
      _
    %262 = vsyncpa [#allocation3], 1
    %s263 = scalar_lea.sflag [#allocation3], 1
    %264 = vsyncpa %s263, 1
    %265 = vsyncpa [#allocation5], 1

</llo_original>
